<compile_context>
chip_gen: v7x
topology: tpu7x:2x2x1
jax: 0.10.0
libtpu: 0.0.40
codegen_flags: <defaults>
</compile_context>

<pallas_src>
import functools

import jax
import jax.numpy as jnp
from jax.experimental import pallas as pl
from jax.experimental.pallas import tpu as pltpu


def _circular_pad_kernel(x_ref, o_ref, *, wl, wr, ht, hb, H, W):
    # x_ref: (Cb, H, W) tile; o_ref: (Cb, H+ht+hb, W+wl+wr) tile.
    # All padding amounts are static Python ints -> the branches below are
    # resolved at trace time (no runtime control flow).

    # --- Bulk interior copy (vast majority of the bytes). ---
    o_ref[:, ht:ht + H, wl:wl + W] = x_ref[...]

    # --- W seams for the middle band (thin column strips). ---
    if wl > 0:
        o_ref[:, ht:ht + H, 0:wl] = x_ref[:, :, W - wl:W]
    if wr > 0:
        o_ref[:, ht:ht + H, wl + W:wl + W + wr] = x_ref[:, :, 0:wr]

    # --- H seams (top/bottom wrapped rows), written already-W-padded. ---
    if ht > 0:
        o_ref[:, 0:ht, wl:wl + W] = x_ref[:, H - ht:H, :]
        if wl > 0:
            o_ref[:, 0:ht, 0:wl] = x_ref[:, H - ht:H, W - wl:W]
        if wr > 0:
            o_ref[:, 0:ht, wl + W:wl + W + wr] = x_ref[:, H - ht:H, 0:wr]
    if hb > 0:
        o_ref[:, ht + H:ht + H + hb, wl:wl + W] = x_ref[:, 0:hb, :]
        if wl > 0:
            o_ref[:, ht + H:ht + H + hb, 0:wl] = x_ref[:, 0:hb, W - wl:W]
        if wr > 0:
            o_ref[:, ht + H:ht + H + hb, wl + W:wl + W + wr] = x_ref[:, 0:hb, 0:wr]


def _round_up(x, m):
    return (x + m - 1) // m * m


def _tiled_plane_bytes(h, w, dtype):
    """Bytes one (h, w) plane actually occupies in VMEM ((sublane,128) tiling)."""
    itemsize = jnp.dtype(dtype).itemsize
    sublane = max(8, 32 // itemsize)          # 8 for f32, 16 for bf16, 32 for int8
    return _round_up(h, sublane) * _round_up(w, 128) * itemsize


def _vmem_budget_and_limit():
    """(per-(in+out)-block byte budget, vmem_limit_bytes) per TPU generation."""
    try:
        cap = int(pltpu.get_tpu_info().vmem_capacity_bytes)
    except Exception:
        cap = 64 * 1024 * 1024                # conservative: assume v7x-sized VMEM
    if cap >= 128 * 1024 * 1024:              # v5e / v6e: 128 MiB physical
        limit = 100 * 1024 * 1024
        budget = 40 * 1024 * 1024
    else:                                     # v7x (64 MiB) or unknown/smaller
        limit = max(cap * 3 // 4, 16 * 1024 * 1024)   # leave ~25% headroom
        budget = max(limit // 4, 4 * 1024 * 1024)     # 2x double-buffer << limit
    return budget, limit


def _choose_channel_block(NC, in_plane_bytes, out_plane_bytes, budget):
    """How many fused (n, c) planes to process per grid step."""
    per_plane = max(in_plane_bytes + out_plane_bytes, 1)
    cb = max(1, min(NC, budget // per_plane))
    # Guarantee >= ~4 grid steps when NC allows (2 per TensorCore on v7x) so
    # both cores get work and prefetch/writeback overlaps compute.
    min_steps = 4 if NC >= 4 else (2 if NC >= 2 else 1)
    cb = min(cb, -(-NC // min_steps))
    # Prefer a divisor of NC (no partial last block) but only within [cb/2, cb];
    # otherwise accept a partial (masked) last block instead of collapsing.
    for d in range(cb, max(1, cb // 2) - 1, -1):
        if NC % d == 0:
            return d
    return cb


def circular_pad(x, padding=(1, 1, 0, 0)):
    """Pallas TPU implementation of F.pad(x, pad=padding, mode='circular') for NCHW x."""
    wl, wr, ht, hb = padding
    N, C, H, W = x.shape

    if min(wl, wr, ht, hb) < 0:
        raise ValueError("circular_pad: negative padding is not supported")
    if wl > W or wr > W or ht > H or hb > H:
        raise ValueError(
            "circular_pad: circular padding must not exceed the corresponding "
            f"input dimension (got padding={padding}, H={H}, W={W})"
        )

    Ho, Wo = H + ht + hb, W + wl + wr
    NC = N * C
    x2 = x.reshape(NC, H, W)

    budget, vmem_limit = _vmem_budget_and_limit()
    in_plane = _tiled_plane_bytes(H, W, x.dtype)
    out_plane = _tiled_plane_bytes(Ho, Wo, x.dtype)
    Cb = _choose_channel_block(NC, in_plane, out_plane, budget)
    grid = (pl.cdiv(NC, Cb),)

    kernel = functools.partial(
        _circular_pad_kernel, wl=wl, wr=wr, ht=ht, hb=hb, H=H, W=W
    )

    itemsize = jnp.dtype(x.dtype).itemsize
    cost = pl.CostEstimate(
        flops=0,
        transcendentals=0,
        bytes_accessed=(NC * H * W + NC * Ho * Wo) * itemsize,
    )

    out2 = pl.pallas_call(
        kernel,
        out_shape=jax.ShapeDtypeStruct((NC, Ho, Wo), x.dtype),
        grid_spec=pltpu.PrefetchScalarGridSpec(
            num_scalar_prefetch=0,
            grid=grid,
            in_specs=[pl.BlockSpec((Cb, H, W), lambda i: (i, 0, 0))],
            out_specs=pl.BlockSpec((Cb, Ho, Wo), lambda i: (i, 0, 0)),
        ),
        compiler_params=pltpu.CompilerParams(
            dimension_semantics=("parallel",),
            vmem_limit_bytes=vmem_limit,
        ),
        cost_estimate=cost,
    )(x2)

    return out2.reshape(N, C, Ho, Wo)


def _reference_circular_pad(x, padding):
    """Pure-JAX reference (mirrors torch.nn.functional.pad mode='circular')."""
    wl, wr, ht, hb = padding
    y = jnp.pad(x, ((0, 0), (0, 0), (0, 0), (wl, wr)), mode="wrap")
    y = jnp.pad(y, ((0, 0), (0, 0), (ht, hb), (0, 0)), mode="wrap")
    return y


if __name__ == "__main__":
    key = jax.random.PRNGKey(0)
    x = jax.random.normal(key, (2, 4, 16, 16), dtype=jnp.float32)

    # Module default: pad only along W.
    padding = (1, 1, 0, 0)
    out = jax.block_until_ready(circular_pad(x, padding))
    ref = _reference_circular_pad(x, padding)
    assert out.shape == (2, 4, 16, 18), out.shape
    assert out.dtype == x.dtype
    assert jnp.allclose(out, ref), "mismatch vs reference circular pad (W only)"

    # Exercise the H-padding seam path too.
    padding2 = (2, 1, 1, 2)
    out2 = jax.block_until_ready(circular_pad(x, padding2))
    ref2 = _reference_circular_pad(x, padding2)
    assert out2.shape == (2, 4, 19, 19), out2.shape
    assert jnp.allclose(out2, ref2), "mismatch vs reference circular pad (H+W)"

    print("KERNEL_OK")
</pallas_src>

<mosaic_0001>
module attributes {stable_mosaic.version = 11 : i64} {
  func.func @_circular_pad_kernel(%arg0: i32, %arg1: memref<2x16x16xf32, #tpu.memory_space<vmem>>, %arg2: memref<2x16x18xf32, #tpu.memory_space<vmem>>) attributes {dimension_semantics = [#tpu.dimension_semantics<parallel>], iteration_bounds = array<i64: 4>, scalar_prefetch = 0 : i64, scratch_operands = 0 : i64, tpu.core_type = #tpu.core_type<tc>, window_params = [{transform_indices = @transform_0, window_bounds = array<i64: 2, 16, 16>}, {transform_indices = @transform_1, window_bounds = array<i64: 2, 16, 18>}]} {
    %c0 = arith.constant 0 : index
    %c0_0 = arith.constant 0 : index
    %c0_1 = arith.constant 0 : index
    %0 = vector.load %arg1[%c0, %c0_0, %c0_1] : memref<2x16x16xf32, #tpu.memory_space<vmem>>, vector<2x16x16xf32>
    %c0_2 = arith.constant 0 : index
    %c0_3 = arith.constant 0 : index
    %c1 = arith.constant 1 : index
    %1 = vector.load %arg2[%c0_2, %c0_3, %c1] : memref<2x16x18xf32, #tpu.memory_space<vmem>>, vector<2x16x16xf32>
    tpu.vector_store %arg2[%c0_2, %c0_3, %c1], %0 {strides = array<i32>} : memref<2x16x18xf32, #tpu.memory_space<vmem>>, vector<2x16x16xf32>,
    %c0_4 = arith.constant 0 : index
    %c0_5 = arith.constant 0 : index
    %c15 = arith.constant 15 : index
    %2 = vector.load %arg1[%c0_4, %c0_5, %c15] : memref<2x16x16xf32, #tpu.memory_space<vmem>>, vector<2x16x1xf32>
    %c0_6 = arith.constant 0 : index
    %c0_7 = arith.constant 0 : index
    %c0_8 = arith.constant 0 : index
    %3 = vector.load %arg2[%c0_6, %c0_7, %c0_8] : memref<2x16x18xf32, #tpu.memory_space<vmem>>, vector<2x16x1xf32>
    tpu.vector_store %arg2[%c0_6, %c0_7, %c0_8], %2 {strides = array<i32>} : memref<2x16x18xf32, #tpu.memory_space<vmem>>, vector<2x16x1xf32>,
    %c0_9 = arith.constant 0 : index
    %c0_10 = arith.constant 0 : index
    %c0_11 = arith.constant 0 : index
    %4 = vector.load %arg1[%c0_9, %c0_10, %c0_11] : memref<2x16x16xf32, #tpu.memory_space<vmem>>, vector<2x16x1xf32>
    %c0_12 = arith.constant 0 : index
    %c0_13 = arith.constant 0 : index
    %c17 = arith.constant 17 : index
    %5 = vector.load %arg2[%c0_12, %c0_13, %c17] : memref<2x16x18xf32, #tpu.memory_space<vmem>>, vector<2x16x1xf32>
    tpu.vector_store %arg2[%c0_12, %c0_13, %c17], %4 {strides = array<i32>} : memref<2x16x18xf32, #tpu.memory_space<vmem>>, vector<2x16x1xf32>,
    return
  }
  func.func @transform_0(%arg0: i32) -> (i32, i32, i32) {
    %c0_i32 = arith.constant 0 : i32
    %c0_i32_0 = arith.constant 0 : i32
    %c0_i32_1 = arith.constant 0 : i32
    return %arg0, %c0_i32, %c0_i32_0 : i32, i32, i32
  }
  func.func @transform_1(%arg0: i32) -> (i32, i32, i32) {
    %c0_i32 = arith.constant 0 : i32
    %c0_i32_0 = arith.constant 0 : i32
    %c0_i32_1 = arith.constant 0 : i32
    return %arg0, %c0_i32, %c0_i32_0 : i32, i32, i32
  }
}

</mosaic_0001>

<llo_original>
// kernel: tpu_custom_call.1
$region0: #{tpu_custom_call.1}
  #allocation0 [shape = 'u32[]', space=smem, size = 0x4, offset = 0x4, fixed_abs, tag = 'smem constant byte address 0x4 - core index']
  #allocation1 [shape = 'u32[144,128]{1,0:T(1,128)}', space=vmem, size = 0x12000, scoped, tag = 'internal scratch']
  %s0 = inlined_call_operand.hbm [shape: f32[8,16,16], index: 0, kind: input, shape index: {}]
  %s1 = inlined_call_operand.hbm [shape: f32[8,16,18], index: 1, kind: output, shape index: {}]
  %s2 = sld [smem:[#allocation0]]
  $region41: #{tpu_custom_call.1} parent=0
    _
  %s4 = ssub.s32 1, %s2
  %s5 = scalar_select 0, %s4, %s2
  $region1: #{tpu_custom_call.1} parent=0
    #allocation2 [shape = 'u8[32768]{0}', space=vmem, size = 0x8000, scoped, tag = 'input window, operand 0']
    #allocation3 [shape = 's32[2]{0}', space=sflag, size = 0x8, scoped, tag = 'scoped memory for tpu_custom_call.1']
    #allocation4 [shape = 's32[2]{0}', space=sflag, size = 0x8, scoped, tag = 'scoped memory for tpu_custom_call.1']
    #allocation5 [shape = 'u8[32768]{0}', space=vmem, size = 0x8000, scoped, tag = 'output window, operand 0']
    %6 = vsyncpa [#allocation3], 0
    %s7 = scalar_lea.sflag [#allocation3], 1
    %8 = vsyncpa %s7, 0
    %9 = vsyncpa [#allocation4], 0
    %s10 = scalar_lea.sflag [#allocation4], 1
    %11 = vsyncpa %s10, 0
    loop: start=0, step=1, limit=6
    $region2: #{tpu_custom_call.1} parent=1 // loop_pre_header
      _
    $region3: #{tpu_custom_call.1} parent=1 // loop_header
      %s13 = sphi 0, %s17
      %p14 = scmp.ge.s32.totalorder %s13, 6
      %s23 = sphi 0, %s25
      %s26 = sphi 0, %s23
      %s27 = sphi 0, %s26
      %s43 = sphi 0, %s27
      %s49 = sphi 0, %s51
      %s52 = sphi 0, %s49
      %s53 = sphi 0, %s52
      %s69 = sphi 0, %s53
    $region4: #{tpu_custom_call.1} parent=1 // loop_header_branch
      %16 = sbr.rel (%p14) target = $region8
    $region5: #{tpu_custom_call.1} parent=1 // loop_body
      %s18 = ssub.s32 %s13, 1
      %s19 = ssub.s32 %s13, 2
      %s20 = sadd.s32 %s13, 1
      %s21 = ssub.s32 %s13, %s20
      %p22 = scmp.eq.s32.totalorder %s21, 0
      %s24 = sadd.s32 %s23, 1
      %s25 = scalar_select %p22, %s23, %s24
      %p28 = pneg %p22
      %p29 = scmp.eq.s32.totalorder %s13, 3
      %p30 = por %p28, %p29
      %p31 = scmp.ne.s32.totalorder %s23, %s26
      %p32 = scmp.eq.s32.totalorder %s13, 0
      %p33 = por %p31, %p32
      %p34 = scmp.ne.s32.totalorder %s23, %s26
      %p35 = scmp.eq.s32.totalorder %s18, 3
      %p36 = por %p34, %p35
      %p37 = scmp.ne.s32.totalorder %s26, %s27
      %p38 = scmp.eq.s32.totalorder %s18, 0
      %p39 = por %p37, %p38
      %p40 = scmp.ne.s32.totalorder %s26, %s27
      %p41 = scmp.eq.s32.totalorder %s19, 3
      %p42 = por %p40, %p41
      %p44 = scmp.ne.s32.totalorder %s27, %s43
      %p45 = scmp.eq.s32.totalorder %s19, 0
      %p46 = por %p44, %p45
      %s47 = ssub.s32 %s13, %s20
      %p48 = scmp.eq.s32.totalorder %s47, 0
      %s50 = sadd.s32 %s49, 1
      %s51 = scalar_select %p48, %s49, %s50
      %p54 = pneg %p48
      %p55 = scmp.eq.s32.totalorder %s13, 3
      %p56 = por %p54, %p55
      %p57 = scmp.ne.s32.totalorder %s49, %s52
      %p58 = scmp.eq.s32.totalorder %s13, 0
      %p59 = por %p57, %p58
      %p60 = scmp.ne.s32.totalorder %s49, %s52
      %p61 = scmp.eq.s32.totalorder %s18, 3
      %p62 = por %p60, %p61
      %p63 = scmp.ne.s32.totalorder %s52, %s53
      %p64 = scmp.eq.s32.totalorder %s18, 0
      %p65 = por %p63, %p64
      %p66 = scmp.ne.s32.totalorder %s52, %s53
      %p67 = scmp.eq.s32.totalorder %s19, 3
      %p68 = por %p66, %p67
      %p70 = scmp.ne.s32.totalorder %s53, %s69
      %p71 = scmp.eq.s32.totalorder %s19, 0
      %p72 = por %p70, %p71
      %p73 = scmp.le.s32.totalorder 1, %s13
      %p74 = scmp.lt.s32.totalorder %s13, 5
      %p75 = pnand %p73, %p74
      %p76 = pneg %p75
      // Predicated region
      $region9: #{tpu_custom_call.1} parent=5 // pred_check
        _
      $region10: #{tpu_custom_call.1} parent=5 // pred_check_branch
        %78 = sbr.rel (%p75) target = $region12
      $region11: #{tpu_custom_call.1} parent=5 // pred_region
        %s79 = ssub.s32 %s13, 1
      $region12: #{tpu_custom_call.1} parent=5 // pred_fallthru
        _
      %p80 = scmp.lt.s32.totalorder %s13, 4
      // Predicated region
      $region13: #{tpu_custom_call.1} parent=5 // pred_check
        %p81 = pneg %p80
      $region14: #{tpu_custom_call.1} parent=5 // pred_check_branch
        %83 = sbr.rel (%p81) target = $region16
      $region15: #{tpu_custom_call.1} parent=5 // pred_region
        // Predicated region
        $region17: #{tpu_custom_call.1} parent=15 // pred_check
          %p84 = pneg %p33
        $region18: #{tpu_custom_call.1} parent=15 // pred_check_branch
          %86 = sbr.rel (%p84) target = $region20
        $region19: #{tpu_custom_call.1} parent=15 // pred_region
          %s87 = sand.u32 %s23, 1
          %s88 = scalar_lea.sflag [#allocation3], %s87
          %s89 = sand.u32 %s23, 1
          %s90 = smul.addr %s89, 32
          %s91 = scalar_lea.vmem [#allocation2], %s90
          %s92 = smul.u32 2, %s13
          %s94 = ssub.s32 512, 512
          %95 = vsyncadd %s88, %s94
          %s96 = smul.addr %s92, 2
          %s97 = smul.addr %s96, 128
          %s98 = scalar_lea.hbm %s0, %s97
          %s99 = sshll.u32 %s91, 4
          %s100 = int_to_ptr.vmem [resolvable:$true] %s99
          %105 = dma.hbm_to_vmem [thread:$0]  %s98, 512, %s100, %s88, 128, 128, 8
        $region20: #{tpu_custom_call.1} parent=15 // pred_fallthru
          _
      $region16: #{tpu_custom_call.1} parent=5 // pred_fallthru
        _
      %p106 = scmp.le.s32.totalorder 1, %s13
      %p107 = scmp.lt.s32.totalorder %s13, 5
      %p108 = pnand %p106, %p107
      %p109 = pneg %p108
      // Predicated region
      $region21: #{tpu_custom_call.1} parent=5 // pred_check
        _
      $region22: #{tpu_custom_call.1} parent=5 // pred_check_branch
        %111 = sbr.rel (%p108) target = $region24
      $region23: #{tpu_custom_call.1} parent=5 // pred_region
        %s112 = ssub.s32 %s13, 1
        %s113 = sand.u32 %s26, 1
        %s114 = scalar_lea.sflag [#allocation3], %s113
        %s115 = sand.u32 %s26, 1
        %s116 = smul.addr %s115, 32
        %s117 = scalar_lea.vmem [#allocation2], %s116
        // Predicated region
        $region25: #{tpu_custom_call.1} parent=23 // pred_check
          %p118 = pneg %p39
        $region26: #{tpu_custom_call.1} parent=23 // pred_check_branch
          %120 = sbr.rel (%p118) target = $region28
        $region27: #{tpu_custom_call.1} parent=23 // pred_region
          %121 = dma.done %s114, 512
        $region28: #{tpu_custom_call.1} parent=23 // pred_fallthru
          _
        %s122 = sand.u32 %s26, 1
        %s123 = scalar_lea.sflag [#allocation3], %s122
        %s124 = sand.u32 %s26, 1
        %s125 = smul.addr %s124, 32
        %s126 = scalar_lea.vmem [#allocation2], %s125
        %p127 = pneg %p39
        %p128 = pneg %p36
        %p129 = pneg %p65
        %p130 = pneg %p62
        %s131 = sand.u32 %s52, 1
        %s132 = scalar_lea.sflag [#allocation4], %s131
        %s133 = sand.u32 %s52, 1
        %s134 = smul.addr %s133, 32
        %s135 = scalar_lea.vmem [#allocation5], %s134
        %s136 = smul.u32 2, %s18
        %s137 = smul.u32 2, %s18
        %v138 = vld [vmem:[%s117] sm:$0xff]
        %v139 = vld [vmem:[%s117 + $0x8] sm:$0xff]
        %v140 = vld [vmem:[%s117 + $0x10] sm:$0xff]
        %v141 = vld [vmem:[%s117 + $0x18] sm:$0xff]
        %146 = vrot.lane.b32.xlu0 %v138, 1
        %v147 = vpop.permute.xlu0 %146
        %148 = vrot.lane.b32.xlu0 %v139, 1
        %v149 = vpop.permute.xlu0 %148
        %150 = vrot.lane.b32.xlu0 %v140, 1
        %v151 = vpop.permute.xlu0 %150
        %152 = vrot.lane.b32.xlu0 %v141, 1
        %v153 = vpop.permute.xlu0 %152
        %vm158 = vcmask 138248
        %159 = vst.msk [vmem:[%s135] sm:$0xff] %vm158, %v147
        %160 = vst.msk [vmem:[%s135 + $0x8] sm:$0xff] %vm158, %v149
        %161 = vst.msk [vmem:[%s135 + $0x10] sm:$0xff] %vm158, %v151
        %162 = vst.msk [vmem:[%s135 + $0x18] sm:$0xff] %vm158, %v153
        %v163 = vld [vmem:[%s117] sm:$0xff]
        %v164 = vld [vmem:[%s117 + $0x8] sm:$0xff]
        %v165 = vld [vmem:[%s117 + $0x10] sm:$0xff]
        %v166 = vld [vmem:[%s117 + $0x18] sm:$0xff]
        %171 = vrot.lane.b32.xlu0 %v163, 113
        %v172 = vpop.permute.xlu0 %171
        %173 = vrot.lane.b32.xlu0 %v164, 113
        %v174 = vpop.permute.xlu0 %173
        %175 = vrot.lane.b32.xlu0 %v165, 113
        %v176 = vpop.permute.xlu0 %175
        %177 = vrot.lane.b32.xlu0 %v166, 113
        %v178 = vpop.permute.xlu0 %177
        %vm183 = vcmask 7168
        %184 = vst.msk [vmem:[%s135] sm:$0xff] %vm183, %v172
        %185 = vst.msk [vmem:[%s135 + $0x8] sm:$0xff] %vm183, %v174
        %186 = vst.msk [vmem:[%s135 + $0x10] sm:$0xff] %vm183, %v176
        %187 = vst.msk [vmem:[%s135 + $0x18] sm:$0xff] %vm183, %v178
        %v188 = vld [vmem:[%s117] sm:$0xff]
        %v189 = vld [vmem:[%s117 + $0x8] sm:$0xff]
        %v190 = vld [vmem:[%s117 + $0x10] sm:$0xff]
        %v191 = vld [vmem:[%s117 + $0x18] sm:$0xff]
        %196 = vrot.lane.b32.xlu0 %v188, 17
        %v197 = vpop.permute.xlu0 %196
        %198 = vrot.lane.b32.xlu0 %v189, 17
        %v199 = vpop.permute.xlu0 %198
        %200 = vrot.lane.b32.xlu0 %v190, 17
        %v201 = vpop.permute.xlu0 %200
        %202 = vrot.lane.b32.xlu0 %v191, 17
        %v203 = vpop.permute.xlu0 %202
        %vm208 = vcmask 146568
        %209 = vst.msk [vmem:[%s135] sm:$0xff] %vm208, %v197
        %210 = vst.msk [vmem:[%s135 + $0x8] sm:$0xff] %vm208, %v199
        %211 = vst.msk [vmem:[%s135 + $0x10] sm:$0xff] %vm208, %v201
        %212 = vst.msk [vmem:[%s135 + $0x18] sm:$0xff] %vm208, %v203
        %s213 = sand.u32 %s52, 1
        %s214 = scalar_lea.sflag [#allocation4], %s213
        %s215 = sand.u32 %s52, 1
        %s216 = smul.addr %s215, 32
        %s217 = scalar_lea.vmem [#allocation5], %s216
        // Predicated region
        $region29: #{tpu_custom_call.1} parent=23 // pred_check
          %p218 = pneg %p62
        $region30: #{tpu_custom_call.1} parent=23 // pred_check_branch
          %220 = sbr.rel (%p218) target = $region32
        $region31: #{tpu_custom_call.1} parent=23 // pred_region
          %s221 = smul.u32 2, %s18
          %s223 = ssub.s32 512, 512
          %224 = vsyncadd %s214, %s223
          %s225 = smul.addr %s221, 2
          %s226 = smul.addr %s225, 128
          %s227 = scalar_lea.hbm %s1, %s226
          %s228 = sshll.u32 %s217, 4
          %s229 = int_to_ptr.vmem [resolvable:$true] %s228
          %234 = dma.vmem_to_hbm [thread:$0]  %s229, 512, %s227, %s214, 128, 128, 8
        $region32: #{tpu_custom_call.1} parent=23 // pred_fallthru
          _
      $region24: #{tpu_custom_call.1} parent=5 // pred_fallthru
        _
      %p235 = scmp.le.s32.totalorder 2, %s13
      // Predicated region
      $region33: #{tpu_custom_call.1} parent=5 // pred_check
        %p236 = pneg %p235
      $region34: #{tpu_custom_call.1} parent=5 // pred_check_branch
        %238 = sbr.rel (%p236) target = $region36
      $region35: #{tpu_custom_call.1} parent=5 // pred_region
        %s239 = ssub.s32 %s13, 2
        // Predicated region
        $region37: #{tpu_custom_call.1} parent=35 // pred_check
          %p240 = pneg %p68
        $region38: #{tpu_custom_call.1} parent=35 // pred_check_branch
          %242 = sbr.rel (%p240) target = $region40
        $region39: #{tpu_custom_call.1} parent=35 // pred_region
          %s243 = sand.u32 %s53, 1
          %s244 = scalar_lea.sflag [#allocation4], %s243
          %s245 = sand.u32 %s53, 1
          %s246 = smul.addr %s245, 32
          %s247 = scalar_lea.vmem [#allocation5], %s246
          %248 = dma.done %s244, 512
        $region40: #{tpu_custom_call.1} parent=35 // pred_fallthru
          _
      $region36: #{tpu_custom_call.1} parent=5 // pred_fallthru
        _
    $region6: #{tpu_custom_call.1} parent=1 // loop_footer
      %s17 = sadd.s32 1, %s13
    $region7: #{tpu_custom_call.1} parent=1 // loop_footer_branch
      %12 = sbr.rel target = $region3
    $region8: #{tpu_custom_call.1} parent=1 // loop_exit
      _
    %249 = vsyncpa [#allocation3], 1
    %s250 = scalar_lea.sflag [#allocation3], 1
    %251 = vsyncpa %s250, 1
    %252 = vsyncpa [#allocation4], 1
    %s253 = scalar_lea.sflag [#allocation4], 1
    %254 = vsyncpa %s253, 1

</llo_original>
